<compile_context>
chip_gen: v5e
topology: v5e:2x2
jax: 0.10.0
libtpu: 0.0.40
codegen_flags: <defaults>
</compile_context>

<pallas_src>
import functools

import jax
import jax.numpy as jnp
from jax.experimental import pallas as pl
from jax.experimental.pallas import tpu as pltpu


def _conv2d_kernel(x_ref, b_ref, shift_ref, o_ref, *, stride, relu):
    """One batch element per grid step.

    x_ref:     (1, Hp, W*Cin)       vertically padded input rows (bf16)
    b_ref:     (KH, W*Cin, OW*Cout) banded, scale-folded weights (bf16)
    shift_ref: (1, OW*Cout)         folded bias/BN shift, f32, lane layout j*Cout+o
    o_ref:     (1, OH, OW*Cout)     lane-dense output block (f32)
    """
    KH = b_ref.shape[0]
    OH, OWCout = o_ref.shape[1], o_ref.shape[2]

    x = x_ref[0]                                              # (Hp, W*Cin)
    acc = jnp.zeros((OH, OWCout), dtype=jnp.float32)
    for kh in range(KH):                                      # unrolled, KH small
        rows = x[kh: kh + (OH - 1) * stride + 1: stride, :]   # (OH, W*Cin) row slab
        acc = acc + jnp.dot(rows, b_ref[kh],
                            preferred_element_type=jnp.float32)

    y = acc + shift_ref[...]                                  # broadcast (1, OW*Cout)
    if relu:
        y = jnp.maximum(y, 0.0)
    o_ref[0] = y.astype(o_ref.dtype)


def conv2d_forward(x_nchw, weight_hwio, bias, *, stride=1, relu=True,
                   same_padding=False, bn_params=None, bn_eps=1e-3,
                   compute_dtype=jnp.bfloat16):
    """Pallas implementation of the MCNN Conv2d block.

    x_nchw:      (N, Cin, H, W) float32
    weight_hwio: (KH, KW, Cin, Cout) float32   (module only uses square kernels)
    bias:        (Cout,) float32
    bn_params:   None, or dict with 'gamma', 'beta', 'mean', 'var' (each (Cout,))
    returns:     (N, Cout, OH, OW) float32
    """
    N, Cin, H, W = x_nchw.shape
    KH, KW, _, Cout = weight_hwio.shape
    pad = (KH - 1) // 2 if same_padding else 0      # matches nn module (square k)
    OH = (H + 2 * pad - KH) // stride + 1
    OW = (W + 2 * pad - KW) // stride + 1
    Hp = H + 2 * pad
    WCin, OWCout = W * Cin, OW * Cout

    # ---- fold conv bias / eval-mode BN (eps=1e-3 per module spec) into
    #      per-channel (scale, shift) ----
    bias = bias.astype(jnp.float32)
    if bn_params is not None:
        scale = bn_params["gamma"].astype(jnp.float32) / jnp.sqrt(
            bn_params["var"].astype(jnp.float32) + bn_eps)
        shift = (bias - bn_params["mean"].astype(jnp.float32)) * scale \
            + bn_params["beta"].astype(jnp.float32)
    else:
        scale = jnp.ones((Cout,), jnp.float32)
        shift = bias

    # ---- banded, scale-folded per-kh weights: B[kh] of shape (W*Cin, OW*Cout)
    #      B[kh][w*Cin + c, j*Cout + o] = scale[o]*w[kh,kw,c,o] iff w == j*stride + kw - pad
    #      Out-of-range taps (horizontal "same" padding) are simply dropped. ----
    w_f32 = weight_hwio.astype(jnp.float32) * scale[None, None, None, :]
    in_col = jnp.arange(W)
    out_col = jnp.arange(OW) * stride - pad
    bands = []
    for kh in range(KH):
        bkh = jnp.zeros((WCin, OWCout), jnp.float32)
        for kw in range(KW):
            sel = (in_col[:, None] == (out_col[None, :] + kw)).astype(jnp.float32)
            bkh = bkh + jnp.kron(sel, w_f32[kh, kw])          # (W*Cin, OW*Cout)
        bands.append(bkh)
    banded_w = jnp.stack(bands).astype(compute_dtype)          # (KH, W*Cin, OW*Cout)

    # per-lane shift in the j*Cout + o layout
    shift_row = jnp.tile(shift, OW).reshape(1, OWCout)

    # ---- input: NCHW -> (N, Hp, W*Cin) bf16.  Transpose + tiny vertical zero
    #      pad (2*pad rows) + bf16 cast fuse into one XLA copy. ----
    x_rows = jnp.transpose(x_nchw, (0, 2, 3, 1)).reshape(N, H, WCin)
    if pad > 0:
        x_rows = jnp.pad(x_rows, ((0, 0), (pad, pad), (0, 0)))
    x_rows = x_rows.astype(compute_dtype)

    kernel = functools.partial(_conv2d_kernel, stride=stride, relu=relu)

    out_rows = pl.pallas_call(
        kernel,
        out_shape=jax.ShapeDtypeStruct((N, OH, OWCout), jnp.float32),
        grid_spec=pltpu.PrefetchScalarGridSpec(
            num_scalar_prefetch=0,
            grid=(N,),
            in_specs=[
                pl.BlockSpec((1, Hp, WCin), lambda n: (n, 0, 0)),
                pl.BlockSpec((KH, WCin, OWCout), lambda n: (0, 0, 0)),
                pl.BlockSpec((1, OWCout), lambda n: (0, 0)),
            ],
            out_specs=pl.BlockSpec((1, OH, OWCout), lambda n: (n, 0, 0)),
        ),
        compiler_params=pltpu.CompilerParams(
            dimension_semantics=("parallel",)),
    )(x_rows, banded_w, shift_row)

    # (N, OH, OW*Cout) -> (N, OH, OW, Cout) is a free metadata reshape; only the
    # final NHWC -> NCHW transpose touches HBM.
    return jnp.transpose(out_rows.reshape(N, OH, OW, Cout), (0, 3, 1, 2))


def _reference(x_nchw, weight_hwio, bias, *, stride, relu, same_padding,
               bn_params, bn_eps=1e-3, compute_dtype=jnp.bfloat16):
    """Reference with numerics matched to the kernel (bf16-rounded inputs,
    scale folded into the weights, f32 accumulation)."""
    Cout = weight_hwio.shape[-1]
    pad = (weight_hwio.shape[0] - 1) // 2 if same_padding else 0
    bias = bias.astype(jnp.float32)
    if bn_params is not None:
        scale = bn_params["gamma"].astype(jnp.float32) / jnp.sqrt(
            bn_params["var"].astype(jnp.float32) + bn_eps)
        shift = (bias - bn_params["mean"].astype(jnp.float32)) * scale \
            + bn_params["beta"].astype(jnp.float32)
    else:
        scale = jnp.ones((Cout,), jnp.float32)
        shift = bias
    w_s = (weight_hwio.astype(jnp.float32) * scale[None, None, None, :]
           ).astype(compute_dtype).astype(jnp.float32)
    x_c = x_nchw.astype(compute_dtype).astype(jnp.float32)
    y = jax.lax.conv_general_dilated(
        x_c, w_s, window_strides=(stride, stride),
        padding=[(pad, pad), (pad, pad)],
        dimension_numbers=("NCHW", "HWIO", "NCHW"),
        precision=jax.lax.Precision.HIGHEST)
    y = y + shift.reshape(1, -1, 1, 1)
    if relu:
        y = jnp.maximum(y, 0.0)
    return y


if __name__ == "__main__":
    # Module config (typical MCNN usage): Conv2d(4, 8, 3, same_padding=True, relu=True)
    in_channels, out_channels, kernel_size, stride = 4, 8, 3, 1
    relu, same_padding, bn = True, True, False

    key = jax.random.PRNGKey(0)
    kx, kw, kb = jax.random.split(key, 3)

    x = jax.random.normal(kx, (2, in_channels, 16, 16), dtype=jnp.float32)
    # Deterministic synthetic parameters; shapes match nn.Conv2d(4, 8, 3).
    weight_hwio = 0.1 * jax.random.normal(
        kw, (kernel_size, kernel_size, in_channels, out_channels),
        dtype=jnp.float32)
    bias = 0.1 * jax.random.normal(kb, (out_channels,), dtype=jnp.float32)
    bn_params = None  # bn=False in this config

    out = conv2d_forward(x, weight_hwio, bias, stride=stride, relu=relu,
                         same_padding=same_padding, bn_params=bn_params)
    out = jax.block_until_ready(out)

    ref = _reference(x, weight_hwio, bias, stride=stride, relu=relu,
                     same_padding=same_padding, bn_params=bn_params)

    assert out.shape == (2, out_channels, 16, 16), out.shape
    err = float(jnp.max(jnp.abs(out - ref)))
    assert err < 1e-3, err
    print("KERNEL_OK")
</pallas_src>

<mosaic_0001>
module attributes {stable_mosaic.version = 11 : i64} {
  func.func @_conv2d_kernel(%arg0: i32, %arg1: memref<1x18x64xbf16, #tpu.memory_space<vmem>>, %arg2: memref<3x64x128xbf16, #tpu.memory_space<vmem>>, %arg3: memref<1x128xf32, #tpu.memory_space<vmem>>, %arg4: memref<1x16x128xf32, #tpu.memory_space<vmem>>) attributes {dimension_semantics = [#tpu.dimension_semantics<parallel>], iteration_bounds = array<i64: 2>, scalar_prefetch = 0 : i64, scratch_operands = 0 : i64, tpu.core_type = #tpu.core_type<tc>, window_params = [{transform_indices = @transform_0, window_bounds = array<i64: 1, 18, 64>}, {pipeline_mode = #tpu.pipeline_mode<synchronous>, transform_indices = @transform_1, window_bounds = array<i64: 3, 64, 128>}, {pipeline_mode = #tpu.pipeline_mode<synchronous>, transform_indices = @transform_2, window_bounds = array<i64: 1, 128>}, {transform_indices = @transform_3, window_bounds = array<i64: 1, 16, 128>}]} {
    %c0 = arith.constant 0 : index
    %c0_0 = arith.constant 0 : index
    %c0_1 = arith.constant 0 : index
    %0 = vector.load %arg1[%c0, %c0_0, %c0_1] : memref<1x18x64xbf16, #tpu.memory_space<vmem>>, vector<1x18x64xbf16>
    %1 = vector.shape_cast %0 : vector<1x18x64xbf16> to vector<18x64xbf16>
    %cst = arith.constant 0.000000e+00 : f32
    %2 = vector.broadcast %cst : f32 to vector<16x128xf32>
    %3 = vector.extract_strided_slice %1 {offsets = [0, 0], sizes = [16, 64], strides = [1, 1]} : vector<18x64xbf16> to vector<16x64xbf16>
    %c0_2 = arith.constant 0 : index
    %c0_3 = arith.constant 0 : index
    %c0_4 = arith.constant 0 : index
    %4 = vector.load %arg2[%c0_2, %c0_3, %c0_4] : memref<3x64x128xbf16, #tpu.memory_space<vmem>>, vector<1x64x128xbf16>
    %5 = vector.shape_cast %4 : vector<1x64x128xbf16> to vector<64x128xbf16>
    %cst_5 = arith.constant dense<0.000000e+00> : vector<16x128xf32>
    %6 = tpu.matmul %3, %5, %cst_5 {dimension_numbers = #tpu.dot_dimension_numbers<[1], [0], [0], [1], [0, 0, 1, 1], [], []>} : vector<16x64xbf16>, vector<64x128xbf16>, vector<16x128xf32> -> vector<16x128xf32>
    %7 = arith.addf %2, %6 : vector<16x128xf32>
    %8 = vector.extract_strided_slice %1 {offsets = [1, 0], sizes = [16, 64], strides = [1, 1]} : vector<18x64xbf16> to vector<16x64xbf16>
    %c1 = arith.constant 1 : index
    %c0_6 = arith.constant 0 : index
    %c0_7 = arith.constant 0 : index
    %9 = vector.load %arg2[%c1, %c0_6, %c0_7] : memref<3x64x128xbf16, #tpu.memory_space<vmem>>, vector<1x64x128xbf16>
    %10 = vector.shape_cast %9 : vector<1x64x128xbf16> to vector<64x128xbf16>
    %cst_8 = arith.constant dense<0.000000e+00> : vector<16x128xf32>
    %11 = tpu.matmul %8, %10, %cst_8 {dimension_numbers = #tpu.dot_dimension_numbers<[1], [0], [0], [1], [0, 0, 1, 1], [], []>} : vector<16x64xbf16>, vector<64x128xbf16>, vector<16x128xf32> -> vector<16x128xf32>
    %12 = arith.addf %7, %11 : vector<16x128xf32>
    %13 = vector.extract_strided_slice %1 {offsets = [2, 0], sizes = [16, 64], strides = [1, 1]} : vector<18x64xbf16> to vector<16x64xbf16>
    %c2 = arith.constant 2 : index
    %c0_9 = arith.constant 0 : index
    %c0_10 = arith.constant 0 : index
    %14 = vector.load %arg2[%c2, %c0_9, %c0_10] : memref<3x64x128xbf16, #tpu.memory_space<vmem>>, vector<1x64x128xbf16>
    %15 = vector.shape_cast %14 : vector<1x64x128xbf16> to vector<64x128xbf16>
    %cst_11 = arith.constant dense<0.000000e+00> : vector<16x128xf32>
    %16 = tpu.matmul %13, %15, %cst_11 {dimension_numbers = #tpu.dot_dimension_numbers<[1], [0], [0], [1], [0, 0, 1, 1], [], []>} : vector<16x64xbf16>, vector<64x128xbf16>, vector<16x128xf32> -> vector<16x128xf32>
    %17 = arith.addf %12, %16 : vector<16x128xf32>
    %c0_12 = arith.constant 0 : index
    %c0_13 = arith.constant 0 : index
    %18 = vector.load %arg3[%c0_12, %c0_13] : memref<1x128xf32, #tpu.memory_space<vmem>>, vector<1x128xf32>
    %19 = vector.broadcast %18 : vector<1x128xf32> to vector<16x128xf32>
    %20 = arith.addf %17, %19 : vector<16x128xf32>
    %cst_14 = arith.constant 0.000000e+00 : f32
    %21 = vector.broadcast %cst_14 : f32 to vector<16x128xf32>
    %22 = arith.maximumf %20, %21 : vector<16x128xf32>
    %c0_15 = arith.constant 0 : index
    %c0_16 = arith.constant 0 : index
    %c0_17 = arith.constant 0 : index
    %23 = vector.load %arg4[%c0_15, %c0_16, %c0_17] : memref<1x16x128xf32, #tpu.memory_space<vmem>>, vector<1x16x128xf32>
    %24 = vector.shape_cast %23 : vector<1x16x128xf32> to vector<16x128xf32>
    %25 = vector.shape_cast %22 : vector<16x128xf32> to vector<1x16x128xf32>
    tpu.vector_store %arg4[%c0_15, %c0_16, %c0_17], %25 {strides = array<i32>} : memref<1x16x128xf32, #tpu.memory_space<vmem>>, vector<1x16x128xf32>,
    return
  }
  func.func @transform_0(%arg0: i32) -> (i32, i32, i32) {
    %c0_i32 = arith.constant 0 : i32
    %c0_i32_0 = arith.constant 0 : i32
    %c0_i32_1 = arith.constant 0 : i32
    return %arg0, %c0_i32, %c0_i32_0 : i32, i32, i32
  }
  func.func @transform_1(%arg0: i32) -> (i32, i32, i32) {
    %c0_i32 = arith.constant 0 : i32
    %c0_i32_0 = arith.constant 0 : i32
    %c0_i32_1 = arith.constant 0 : i32
    %c0_i32_2 = arith.constant 0 : i32
    return %c0_i32, %c0_i32_0, %c0_i32_1 : i32, i32, i32
  }
  func.func @transform_2(%arg0: i32) -> (i32, i32) {
    %c0_i32 = arith.constant 0 : i32
    %c0_i32_0 = arith.constant 0 : i32
    %c0_i32_1 = arith.constant 0 : i32
    return %c0_i32, %c0_i32_0 : i32, i32
  }
  func.func @transform_3(%arg0: i32) -> (i32, i32, i32) {
    %c0_i32 = arith.constant 0 : i32
    %c0_i32_0 = arith.constant 0 : i32
    %c0_i32_1 = arith.constant 0 : i32
    return %arg0, %c0_i32, %c0_i32_0 : i32, i32, i32
  }
}

</mosaic_0001>

<llo_original>
// kernel: tpu_custom_call.1
$region0: #{tpu_custom_call.1}
  #allocation0 [shape = 'u32[]', space=smem, size = 0x4, offset = 0x4, fixed_abs, tag = 'smem constant byte address 0x4 - core index']
  #allocation1 [shape = 'u32[72,128]{1,0:T(1,128)}', space=vmem, size = 0x9000, scoped, tag = 'internal scratch']
  %s0 = inlined_call_operand.vmem [shape: bf16[2,18,64], index: 0, kind: input, shape index: {}]
  %s1 = inlined_call_operand.hbm [shape: bf16[3,64,128], index: 1, kind: input, shape index: {}]
  %s2 = inlined_call_operand.vmem [shape: f32[1,128], index: 2, kind: input, shape index: {}]
  %s3 = inlined_call_operand.hbm [shape: f32[2,16,128], index: 3, kind: output, shape index: {}]
  %s4 = sld [smem:[#allocation0]]
  $region49: #{tpu_custom_call.1} parent=0
    _
  %s6 = ssub.s32 1, %s4
  %s7 = scalar_select 0, %s6, %s4
  $region1: #{tpu_custom_call.1} parent=0
    #allocation2 [shape = 'u8[49152]{0}', space=vmem, size = 0xc000, scoped, tag = 'input window, operand 1, single buffered']
    #allocation3 [shape = 's32[2]{0}', space=sflag, size = 0x8, scoped, tag = 'scoped memory for tpu_custom_call.1']
    #allocation4 [shape = 's32[2]{0}', space=sflag, size = 0x8, scoped, tag = 'scoped memory for tpu_custom_call.1']
    #allocation5 [shape = 'u8[16384]{0}', space=vmem, size = 0x4000, scoped, tag = 'output window, operand 0']
    %8 = vsyncpa [#allocation3], 0
    %9 = vsyncpa [#allocation4], 0
    %s10 = scalar_lea.sflag [#allocation4], 1
    %11 = vsyncpa %s10, 0
    loop: start=0, step=1, limit=4
    $region2: #{tpu_custom_call.1} parent=1 // loop_pre_header
      _
    $region3: #{tpu_custom_call.1} parent=1 // loop_header
      %s13 = sphi 0, %s17
      %p14 = scmp.ge.s32.totalorder %s13, 4
      %s23 = sphi 0, %s25
      %s26 = sphi 0, %s23
      %s27 = sphi 0, %s26
      %s43 = sphi 0, %s27
      %s47 = sphi 0, %s47
      %s49 = sphi 0, %s47
      %s50 = sphi 0, %s49
      %s64 = sphi 0, %s50
      %s68 = sphi 0, %s68
      %s70 = sphi 0, %s68
      %s71 = sphi 0, %s70
      %s85 = sphi 0, %s71
      %s91 = sphi 0, %s93
      %s94 = sphi 0, %s91
      %s95 = sphi 0, %s94
      %s111 = sphi 0, %s95
    $region4: #{tpu_custom_call.1} parent=1 // loop_header_branch
      %16 = sbr.rel (%p14) target = $region8
    $region5: #{tpu_custom_call.1} parent=1 // loop_body
      %s18 = ssub.s32 %s13, 1
      %s19 = ssub.s32 %s13, 2
      %s20 = sadd.s32 %s13, 1
      %s21 = ssub.s32 %s13, %s20
      %p22 = scmp.eq.s32.totalorder %s21, 0
      %s24 = sadd.s32 %s23, 1
      %s25 = scalar_select %p22, %s23, %s24
      %p28 = pneg %p22
      %p29 = scmp.eq.s32.totalorder %s13, 1
      %p30 = por %p28, %p29
      %p31 = scmp.ne.s32.totalorder %s23, %s26
      %p32 = scmp.eq.s32.totalorder %s13, 0
      %p33 = por %p31, %p32
      %p34 = scmp.ne.s32.totalorder %s23, %s26
      %p35 = scmp.eq.s32.totalorder %s18, 1
      %p36 = por %p34, %p35
      %p37 = scmp.ne.s32.totalorder %s26, %s27
      %p38 = scmp.eq.s32.totalorder %s18, 0
      %p39 = por %p37, %p38
      %p40 = scmp.ne.s32.totalorder %s26, %s27
      %p41 = scmp.eq.s32.totalorder %s19, 1
      %p42 = por %p40, %p41
      %p44 = scmp.ne.s32.totalorder %s27, %s43
      %p45 = scmp.eq.s32.totalorder %s19, 0
      %p46 = por %p44, %p45
      %s48 = sadd.s32 %s47, 1
      %p51 = scmp.eq.s32.totalorder %s13, 1
      %p52 = scmp.ne.s32.totalorder %s47, %s49
      %p53 = scmp.eq.s32.totalorder %s13, 0
      %p54 = por %p52, %p53
      %p55 = scmp.ne.s32.totalorder %s47, %s49
      %p56 = scmp.eq.s32.totalorder %s18, 1
      %p57 = por %p55, %p56
      %p58 = scmp.ne.s32.totalorder %s49, %s50
      %p59 = scmp.eq.s32.totalorder %s18, 0
      %p60 = por %p58, %p59
      %p61 = scmp.ne.s32.totalorder %s49, %s50
      %p62 = scmp.eq.s32.totalorder %s19, 1
      %p63 = por %p61, %p62
      %p65 = scmp.ne.s32.totalorder %s50, %s64
      %p66 = scmp.eq.s32.totalorder %s19, 0
      %p67 = por %p65, %p66
      %s69 = sadd.s32 %s68, 1
      %p72 = scmp.eq.s32.totalorder %s13, 1
      %p73 = scmp.ne.s32.totalorder %s68, %s70
      %p74 = scmp.eq.s32.totalorder %s13, 0
      %p75 = por %p73, %p74
      %p76 = scmp.ne.s32.totalorder %s68, %s70
      %p77 = scmp.eq.s32.totalorder %s18, 1
      %p78 = por %p76, %p77
      %p79 = scmp.ne.s32.totalorder %s70, %s71
      %p80 = scmp.eq.s32.totalorder %s18, 0
      %p81 = por %p79, %p80
      %p82 = scmp.ne.s32.totalorder %s70, %s71
      %p83 = scmp.eq.s32.totalorder %s19, 1
      %p84 = por %p82, %p83
      %p86 = scmp.ne.s32.totalorder %s71, %s85
      %p87 = scmp.eq.s32.totalorder %s19, 0
      %p88 = por %p86, %p87
      %s89 = ssub.s32 %s13, %s20
      %p90 = scmp.eq.s32.totalorder %s89, 0
      %s92 = sadd.s32 %s91, 1
      %s93 = scalar_select %p90, %s91, %s92
      %p96 = pneg %p90
      %p97 = scmp.eq.s32.totalorder %s13, 1
      %p98 = por %p96, %p97
      %p99 = scmp.ne.s32.totalorder %s91, %s94
      %p100 = scmp.eq.s32.totalorder %s13, 0
      %p101 = por %p99, %p100
      %p102 = scmp.ne.s32.totalorder %s91, %s94
      %p103 = scmp.eq.s32.totalorder %s18, 1
      %p104 = por %p102, %p103
      %p105 = scmp.ne.s32.totalorder %s94, %s95
      %p106 = scmp.eq.s32.totalorder %s18, 0
      %p107 = por %p105, %p106
      %p108 = scmp.ne.s32.totalorder %s94, %s95
      %p109 = scmp.eq.s32.totalorder %s19, 1
      %p110 = por %p108, %p109
      %p112 = scmp.ne.s32.totalorder %s95, %s111
      %p113 = scmp.eq.s32.totalorder %s19, 0
      %p114 = por %p112, %p113
      %p115 = scmp.le.s32.totalorder 1, %s13
      %p116 = scmp.lt.s32.totalorder %s13, 3
      %p117 = pnand %p115, %p116
      %p118 = pneg %p117
      // Predicated region
      $region9: #{tpu_custom_call.1} parent=5 // pred_check
        _
      $region10: #{tpu_custom_call.1} parent=5 // pred_check_branch
        %120 = sbr.rel (%p117) target = $region12
      $region11: #{tpu_custom_call.1} parent=5 // pred_region
        %s121 = ssub.s32 %s13, 1
        // Predicated region
        $region13: #{tpu_custom_call.1} parent=11 // pred_check
          %p122 = pneg %p60
        $region14: #{tpu_custom_call.1} parent=11 // pred_check_branch
          %124 = sbr.rel (%p122) target = $region16
        $region15: #{tpu_custom_call.1} parent=11 // pred_region
          %126 = vsyncadd [#allocation3], 0
          %s127 = sshll.u32 %s1, 4
          %s128 = int_to_ptr.hbm [resolvable:$true] %s127
          %s129 = sshll.u32 [#allocation2], 4
          %s130 = int_to_ptr.vmem [resolvable:$true] %s129
          %135 = dma.hbm_to_vmem [thread:$0]  %s128, 1536, %s130, [#allocation3], 64, 64, 4
        $region16: #{tpu_custom_call.1} parent=11 // pred_fallthru
          _
        // Predicated region
        $region17: #{tpu_custom_call.1} parent=11 // pred_check
          %p136 = pneg %p81
        $region18: #{tpu_custom_call.1} parent=11 // pred_check_branch
          %138 = sbr.rel (%p136) target = $region20
        $region19: #{tpu_custom_call.1} parent=11 // pred_region
          _
        $region20: #{tpu_custom_call.1} parent=11 // pred_fallthru
          _
      $region12: #{tpu_custom_call.1} parent=5 // pred_fallthru
        _
      %p139 = scmp.lt.s32.totalorder %s13, 2
      // Predicated region
      $region21: #{tpu_custom_call.1} parent=5 // pred_check
        %p140 = pneg %p139
      $region22: #{tpu_custom_call.1} parent=5 // pred_check_branch
        %142 = sbr.rel (%p140) target = $region24
      $region23: #{tpu_custom_call.1} parent=5 // pred_region
        // Predicated region
        $region25: #{tpu_custom_call.1} parent=23 // pred_check
          %p143 = pneg %p33
        $region26: #{tpu_custom_call.1} parent=23 // pred_check_branch
          %145 = sbr.rel (%p143) target = $region28
        $region27: #{tpu_custom_call.1} parent=23 // pred_region
          %p146 = scmp.lt.s32.totalorder %s13, 1
          %s147 = scalar_select %p146, %s13, 1
          %s148 = smul.addr %s147, 3
          %s149 = smul.addr %s148, 4
          %s150 = scalar_lea.vmem %s0, %s149
        $region28: #{tpu_custom_call.1} parent=23 // pred_fallthru
          _
      $region24: #{tpu_custom_call.1} parent=5 // pred_fallthru
        _
      %p151 = scmp.le.s32.totalorder 1, %s13
      %p152 = scmp.lt.s32.totalorder %s13, 3
      %p153 = pnand %p151, %p152
      %p154 = pneg %p153
      // Predicated region
      $region29: #{tpu_custom_call.1} parent=5 // pred_check
        _
      $region30: #{tpu_custom_call.1} parent=5 // pred_check_branch
        %156 = sbr.rel (%p153) target = $region32
      $region31: #{tpu_custom_call.1} parent=5 // pred_region
        %s157 = ssub.s32 %s13, 1
        // Predicated region
        $region33: #{tpu_custom_call.1} parent=31 // pred_check
          %p158 = pneg %p60
        $region34: #{tpu_custom_call.1} parent=31 // pred_check_branch
          %160 = sbr.rel (%p158) target = $region36
        $region35: #{tpu_custom_call.1} parent=31 // pred_region
          %162 = dma.done [#allocation3], 1536
        $region36: #{tpu_custom_call.1} parent=31 // pred_fallthru
          _
        %p163 = scmp.lt.s32.totalorder %s18, 1
        %s164 = scalar_select %p163, %s18, 1
        %s165 = smul.addr %s164, 3
        %s166 = smul.addr %s165, 4
        %s167 = scalar_lea.vmem %s0, %s166
        %p168 = pneg %p39
        %p169 = pneg %p36
        %p170 = pneg %p60
        %p171 = pneg %p57
        %p172 = pneg %p81
        %p173 = pneg %p78
        %p174 = pneg %p107
        %p175 = pneg %p104
        %s176 = sand.u32 %s94, 1
        %s177 = scalar_lea.sflag [#allocation4], %s176
        %s178 = sand.u32 %s94, 1
        %s179 = smul.addr %s178, 16
        %s180 = scalar_lea.vmem [#allocation5], %s179
        %p181 = scmp.lt.s32.totalorder %s18, 1
        %s182 = scalar_select %p181, %s18, 1
        %s183 = smul.addr %s182, 3
        %s184 = smul.addr %s183, 4
        %s185 = scalar_lea.vmem %s0, %s184
        %v187 = vld [vmem:[%s185] sm:$0xf]
        %v188 = vld [vmem:[%s185 + $0x4] sm:$0xf]
        %v189 = vld [vmem:[%s185 + $0x8] sm:$0x1]
        %v190 = vld [vmem:[#allocation2] sm:$0xf]
        %v191 = vld [vmem:[#allocation2 + $0x4] sm:$0xf]
        %v192 = vld [vmem:[#allocation2 + $0x8] sm:$0xf]
        %v193 = vld [vmem:[#allocation2 + $0xc] sm:$0xf]
        %v194 = vld [vmem:[#allocation2 + $0x10] sm:$0xf]
        %v195 = vld [vmem:[#allocation2 + $0x14] sm:$0xf]
        %v196 = vld [vmem:[#allocation2 + $0x18] sm:$0xf]
        %v197 = vld [vmem:[#allocation2 + $0x1c] sm:$0xf]
        %s198 = scalar_lea.vmem [#allocation2], 32
        %v199 = vld [vmem:[%s198] sm:$0xf]
        %v200 = vld [vmem:[%s198 + $0x4] sm:$0xf]
        %v201 = vld [vmem:[%s198 + $0x8] sm:$0xf]
        %v202 = vld [vmem:[%s198 + $0xc] sm:$0xf]
        %v203 = vld [vmem:[%s198 + $0x10] sm:$0xf]
        %v204 = vld [vmem:[%s198 + $0x14] sm:$0xf]
        %v205 = vld [vmem:[%s198 + $0x18] sm:$0xf]
        %v206 = vld [vmem:[%s198 + $0x1c] sm:$0xf]
        %v210 = vunpack.c.l.b16 %v187
        %v211 = vunpack.c.l.b16 %v188
        %v212 = vunpack.c.l.b16 %v189
        %v213 = vpack.c.b16 %v211, %v210
        %v214 = vpack.c.b16 %v212, %v212
        %vm215 = vsmask.f32 7424
        %v217 = vshrl.u32 %v213, 16
        %v219 = vshll.u32 %v213, 16
        %v221 = vrot.slane %v219, 1
        %v222 = vor.u32 %v217, %v221
        %v224 = vshll.u32 %v214, 16
        %v226 = vrot.slane %v224, 1
        %v227 = vsel %vm215, %v222, %v226
        %v236 = vunpack.c.l.b16 %v199
        %v237 = vunpack.c.l.b16 %v200
        %v238 = vunpack.c.l.b16 %v201
        %v239 = vunpack.c.l.b16 %v202
        %v240 = vunpack.c.l.b16 %v203
        %v241 = vunpack.c.l.b16 %v204
        %v242 = vunpack.c.l.b16 %v205
        %v243 = vunpack.c.l.b16 %v206
        %v244 = vpack.c.b16 %v237, %v236
        %v245 = vpack.c.b16 %v239, %v238
        %v246 = vpack.c.b16 %v241, %v240
        %v247 = vpack.c.b16 %v243, %v242
        %vm252 = vcmask 523264
        %v254 = vsel %vm252, %v227, 0
        %256 = vmatpush.bf16.msra.mxu0 0
        %257 = vmatpush.bf16.msra.mxu0 0
        %258 = vmatpush.bf16.msra.mxu0 0
        %259 = vmatpush.bf16.msra.mxu0 0
        %260 = vmatpush.bf16.msra.mxu0 %v247
        %261 = vmatpush.bf16.msra.mxu0 %v246
        %262 = vmatpush.bf16.msra.mxu0 %v245
        %263 = vmatpush.bf16.msra.mxu0 %v244
        %264 = vmatmul.bf16.gmra.mxu0 %v254
        %v265 = vpop.f32.mrf.mxu0
        %v266 = vadd.f32 0.0, %v265
        %v267 = vpop.f32.mrf.mxu0
        %v268 = vadd.f32 0.0, %v267
        %269 = vdwg.mxu0
        %v278 = vunpack.c.l.b16 %v190
        %v279 = vunpack.c.l.b16 %v191
        %v280 = vunpack.c.l.b16 %v192
        %v281 = vunpack.c.l.b16 %v193
        %v282 = vunpack.c.l.b16 %v194
        %v283 = vunpack.c.l.b16 %v195
        %v284 = vunpack.c.l.b16 %v196
        %v285 = vunpack.c.l.b16 %v197
        %v286 = vpack.c.b16 %v279, %v278
        %v287 = vpack.c.b16 %v281, %v280
        %v288 = vpack.c.b16 %v283, %v282
        %v289 = vpack.c.b16 %v285, %v284
        %v294 = vsel %vm252, %v213, 0
        %296 = vmatpush.bf16.msra.mxu0 0
        %297 = vmatpush.bf16.msra.mxu0 0
        %298 = vmatpush.bf16.msra.mxu0 0
        %299 = vmatpush.bf16.msra.mxu0 0
        %300 = vmatpush.bf16.msra.mxu0 %v289
        %301 = vmatpush.bf16.msra.mxu0 %v288
        %302 = vmatpush.bf16.msra.mxu0 %v287
        %303 = vmatpush.bf16.msra.mxu0 %v286
        %304 = vmatmul.bf16.gmra.mxu0 %v294
        %v305 = vpop.f32.mrf.mxu0
        %v306 = vadd.f32 %v266, %v305
        %v307 = vpop.f32.mrf.mxu0
        %v308 = vadd.f32 %v268, %v307
        %309 = vdwg.mxu0
        %s310 = scalar_lea.vmem [#allocation2], 64
        %v311 = vld [vmem:[%s310] sm:$0xf]
        %v312 = vld [vmem:[%s310 + $0x4] sm:$0xf]
        %v313 = vld [vmem:[%s310 + $0x8] sm:$0xf]
        %v314 = vld [vmem:[%s310 + $0xc] sm:$0xf]
        %v315 = vld [vmem:[%s310 + $0x10] sm:$0xf]
        %v316 = vld [vmem:[%s310 + $0x14] sm:$0xf]
        %v317 = vld [vmem:[%s310 + $0x18] sm:$0xf]
        %v318 = vld [vmem:[%s310 + $0x1c] sm:$0xf]
        %vm319 = vcmask 1046528
        %v320 = vrot.slane %v213, 1
        %v321 = vrot.slane %v214, 1
        %v322 = vsel %vm319, %v320, %v321
        %v331 = vunpack.c.l.b16 %v311
        %v332 = vunpack.c.l.b16 %v312
        %v333 = vunpack.c.l.b16 %v313
        %v334 = vunpack.c.l.b16 %v314
        %v335 = vunpack.c.l.b16 %v315
        %v336 = vunpack.c.l.b16 %v316
        %v337 = vunpack.c.l.b16 %v317
        %v338 = vunpack.c.l.b16 %v318
        %v339 = vpack.c.b16 %v332, %v331
        %v340 = vpack.c.b16 %v334, %v333
        %v341 = vpack.c.b16 %v336, %v335
        %v342 = vpack.c.b16 %v338, %v337
        %v348 = vsel %vm252, %v322, 0
        %350 = vmatpush.bf16.msra.mxu0 0
        %351 = vmatpush.bf16.msra.mxu0 0
        %352 = vmatpush.bf16.msra.mxu0 0
        %353 = vmatpush.bf16.msra.mxu0 0
        %354 = vmatpush.bf16.msra.mxu0 %v342
        %355 = vmatpush.bf16.msra.mxu0 %v341
        %356 = vmatpush.bf16.msra.mxu0 %v340
        %357 = vmatpush.bf16.msra.mxu0 %v339
        %358 = vmatmul.bf16.gmra.mxu0 %v348
        %v359 = vpop.f32.mrf.mxu0
        %v360 = vadd.f32 0.0, %v359
        %v361 = vpop.f32.mrf.mxu0
        %v362 = vadd.f32 0.0, %v361
        %363 = vdwg.mxu0
        %v364 = vadd.f32 %v306, %v360
        %v365 = vadd.f32 %v308, %v362
        %v366 = vld [vmem:[%s2] sm:$0x1]
        %v368 = vperm.slane %v366, 0
        %v370 = vadd.f32 %v364, %v368
        %v371 = vadd.f32 %v365, %v368
        %v372 = vmax.f32 %v370, 0.0
        %v373 = vmax.f32 %v371, 0.0
        %374 = vst [vmem:[%s180] sm:$0xff] %v372
        %375 = vst [vmem:[%s180 + $0x8] sm:$0xff] %v373
        %s376 = sand.u32 %s94, 1
        %s377 = scalar_lea.sflag [#allocation4], %s376
        %s378 = sand.u32 %s94, 1
        %s379 = smul.addr %s378, 16
        %s380 = scalar_lea.vmem [#allocation5], %s379
        // Predicated region
        $region37: #{tpu_custom_call.1} parent=31 // pred_check
          %p381 = pneg %p104
        $region38: #{tpu_custom_call.1} parent=31 // pred_check_branch
          %383 = sbr.rel (%p381) target = $region40
        $region39: #{tpu_custom_call.1} parent=31 // pred_region
          %385 = vsyncadd %s377, 0
          %s386 = smul.addr %s18, 2
          %s387 = smul.addr %s386, 8
          %s388 = scalar_lea.hbm %s3, %s387
          %s389 = sshll.u32 %s380, 4
          %s390 = int_to_ptr.vmem [resolvable:$true] %s389
          %s391 = sshll.u32 %s388, 4
          %s392 = int_to_ptr.hbm [resolvable:$true] %s391
          %397 = dma.vmem_to_hbm [thread:$0]  %s390, 256, %s392, %s377, 128, 128, 8
        $region40: #{tpu_custom_call.1} parent=31 // pred_fallthru
          _
      $region32: #{tpu_custom_call.1} parent=5 // pred_fallthru
        _
      %p398 = scmp.le.s32.totalorder 2, %s13
      // Predicated region
      $region41: #{tpu_custom_call.1} parent=5 // pred_check
        %p399 = pneg %p398
      $region42: #{tpu_custom_call.1} parent=5 // pred_check_branch
        %401 = sbr.rel (%p399) target = $region44
      $region43: #{tpu_custom_call.1} parent=5 // pred_region
        %s402 = ssub.s32 %s13, 2
        // Predicated region
        $region45: #{tpu_custom_call.1} parent=43 // pred_check
          %p403 = pneg %p110
        $region46: #{tpu_custom_call.1} parent=43 // pred_check_branch
          %405 = sbr.rel (%p403) target = $region48
        $region47: #{tpu_custom_call.1} parent=43 // pred_region
          %s406 = sand.u32 %s95, 1
          %s407 = scalar_lea.sflag [#allocation4], %s406
          %s408 = sand.u32 %s95, 1
          %s409 = smul.addr %s408, 16
          %s410 = scalar_lea.vmem [#allocation5], %s409
          %412 = dma.done %s407, 256
        $region48: #{tpu_custom_call.1} parent=43 // pred_fallthru
          _
      $region44: #{tpu_custom_call.1} parent=5 // pred_fallthru
        _
    $region6: #{tpu_custom_call.1} parent=1 // loop_footer
      %s17 = sadd.s32 1, %s13
    $region7: #{tpu_custom_call.1} parent=1 // loop_footer_branch
      %12 = sbr.rel target = $region3
    $region8: #{tpu_custom_call.1} parent=1 // loop_exit
      _
    %413 = vsyncpa [#allocation3], 1
    %s414 = scalar_lea.sflag [#allocation3], 1
    %415 = vsyncpa %s414, 1
    %416 = vsyncpa [#allocation4], 1
    %s417 = scalar_lea.sflag [#allocation4], 1
    %418 = vsyncpa %s417, 1

</llo_original>
